<compile_context>
chip_gen: v5e
topology: v5e:2x2
jax: 0.10.0
libtpu: 0.0.40
codegen_flags: <defaults>
</compile_context>

<pallas_src>
import math
from functools import partial

import jax
import jax.numpy as jnp
from jax.experimental import pallas as pl
from jax.experimental.pallas import tpu as pltpu

_EPS = 1e-5     # nn.GroupNorm default eps
_GROUPS = 8     # AdaGN uses num_groups=8


def _gelu_exact(x):
    # nn.GELU() default (exact, erf-based)
    return 0.5 * x * (1.0 + jax.lax.erf(x * (1.0 / math.sqrt(2.0))))


def _croll(x, shift, axis):
    """Circular shift; skips the no-op case (avoids zero-length concats)."""
    if shift % x.shape[axis] == 0:
        return x
    return jnp.roll(x, shift, axis=axis)


# ----------------------------------------------------------------------------
# Fused modulation projections: all 8 Linear layers of one UNetConv in a
# single pallas_call  (z @ [Wzs1|Wzb1|Wzs2|Wzb2],  t @ [Wts1|Wtb1|Wts2|Wtb2]).
# ----------------------------------------------------------------------------
def _mods_kernel(z_ref, t_ref, wz_ref, bz_ref, wt_ref, bt_ref, zo_ref, to_ref):
    zo_ref[...] = (jnp.dot(z_ref[...], wz_ref[...],
                           preferred_element_type=jnp.float32) + bz_ref[...])
    to_ref[...] = (jnp.dot(t_ref[...], wt_ref[...],
                           preferred_element_type=jnp.float32) + bt_ref[...])


def _unet_conv_mods(z, t, p):
    """Returns (N, 4, C) effective [scale1, bias1, scale2, bias2] with the
    GroupNorm affine (gamma/beta) folded into the AdaGN modulation."""
    n = z.shape[0]
    c = p["z_s1"][0].shape[1]
    wz = jnp.concatenate([p["z_s1"][0], p["z_b1"][0], p["z_s2"][0], p["z_b2"][0]], axis=1)
    bz = jnp.concatenate([p["z_s1"][1], p["z_b1"][1], p["z_s2"][1], p["z_b2"][1]], axis=1)
    wt = jnp.concatenate([p["t_s1"][0], p["t_b1"][0], p["t_s2"][0], p["t_b2"][0]], axis=1)
    bt = jnp.concatenate([p["t_s1"][1], p["t_b1"][1], p["t_s2"][1], p["t_b2"][1]], axis=1)

    vmem = pl.BlockSpec(memory_space=pltpu.MemorySpace.VMEM)
    zp, tp = pl.pallas_call(
        _mods_kernel,
        out_shape=(jax.ShapeDtypeStruct((n, 4 * c), jnp.float32),
                   jax.ShapeDtypeStruct((n, 4 * c), jnp.float32)),
        in_specs=[vmem] * 6,
        out_specs=(vmem, vmem),
    )(z, t, wz, bz, wt, bt)

    zs1, zb1, zs2, zb2 = jnp.split(zp, 4, axis=1)
    ts1, tb1, ts2, tb2 = jnp.split(tp, 4, axis=1)
    g1, b1 = p["gn1_gamma"], p["gn1_beta"]          # (1, C)
    g2, b2 = p["gn2_gamma"], p["gn2_beta"]
    # z_s*(t_s*(g*xhat + b) + t_b) + z_b == (z_s*t_s*g)*xhat + (z_s*(t_s*b+t_b)+z_b)
    s1 = zs1 * ts1 * g1
    o1 = zs1 * (ts1 * b1 + tb1) + zb1
    s2 = zs2 * ts2 * g2
    o2 = zs2 * (ts2 * b2 + tb2) + zb2
    return jnp.stack([s1, o1, s2, o2], axis=1)      # (N, 4, C)


# ----------------------------------------------------------------------------
# Fused DownStep kernel: maxpool + (conv3x3 -> GN -> AdaGN -> act) x 4,
# one batch element per grid step, all intermediates resident in VMEM.
# ----------------------------------------------------------------------------
def _conv_gn_block(x3d, w_ref, m_c2g_ref, m_g2c_ref, scale, bias, *, residual):
    """3x3 circular conv (im2col, one MXU matmul) + GroupNorm + AdaGN + act.

    x3d:        (H, W, Cin) f32 activation
    w_ref:      (9*Cin, Cout) bf16 im2col weights (tap-major: dh, dw, cin)
    m_c2g_ref:  (Cout, G) f32 channel->group mask pre-scaled by 1/(H*W*Cg)
    m_g2c_ref:  (G, Cout) f32 group->channel broadcast mask
    scale/bias: (1, Cout) f32 effective AdaGN scale/bias (GN affine folded in)
    returns     (H*W, Cout) f32
    """
    h, w, cin = x3d.shape
    taps = []
    for dh in range(3):
        xh = _croll(x3d, 1 - dh, 0)                  # circular shift along H
        for dw in range(3):
            taps.append(_croll(xh, 1 - dw, 1).reshape(h * w, cin))
    patch = jnp.concatenate(taps, axis=1).astype(jnp.bfloat16)     # (HW, 9*Cin)
    acc = jnp.dot(patch, w_ref[...], preferred_element_type=jnp.float32)

    # GroupNorm(8): two-pass (centered) statistics, biased variance, eps=1e-5.
    m_c2g = m_c2g_ref[...]
    m_g2c = m_g2c_ref[...]
    chan_sum = jnp.sum(acc, axis=0, keepdims=True)                 # (1, Cout)
    mean_c = jnp.dot(jnp.dot(chan_sum, m_c2g, preferred_element_type=jnp.float32),
                     m_g2c, preferred_element_type=jnp.float32)    # (1, Cout)
    xc = acc - mean_c
    chan_sq = jnp.sum(xc * xc, axis=0, keepdims=True)              # (1, Cout)
    g_var = jnp.dot(chan_sq, m_c2g, preferred_element_type=jnp.float32)   # (1, G)
    inv_c = jnp.dot(jax.lax.rsqrt(g_var + _EPS), m_g2c,
                    preferred_element_type=jnp.float32)            # (1, Cout)

    out = scale * (xc * inv_c) + bias                              # AdaGN
    if residual:
        return out + _gelu_exact(out)      # x = x + gelu(x)   (after gn_2)
    return _gelu_exact(out)                # gelu between the two convs


def _down_step_kernel(x_ref, w1a_ref, w1b_ref, w2a_ref, w2b_ref,
                      mods1_ref, mods2_ref,
                      m1cg_ref, m1gc_ref, m2cg_ref, m2gc_ref, o_ref):
    xs = x_ref[0]                          # (4, Ho, Wo, Cin): 2x2 pool taps leading
    pooled = jnp.max(xs, axis=0)           # (Ho, Wo, Cin)  == MaxPool2d(2)

    ho, wo, _ = pooled.shape
    c1 = w1a_ref.shape[1]
    c2 = w2a_ref.shape[1]
    md1 = mods1_ref[0]                     # (4, C1): [scale1, bias1, scale2, bias2]
    md2 = mods2_ref[0]                     # (4, C2)

    # UNetConv #1
    h = _conv_gn_block(pooled, w1a_ref, m1cg_ref, m1gc_ref,
                       md1[0:1], md1[1:2], residual=False)
    h = _conv_gn_block(h.reshape(ho, wo, c1), w1b_ref, m1cg_ref, m1gc_ref,
                       md1[2:3], md1[3:4], residual=True)
    # UNetConv #2
    h = _conv_gn_block(h.reshape(ho, wo, c1), w2a_ref, m2cg_ref, m2gc_ref,
                       md2[0:1], md2[1:2], residual=False)
    h = _conv_gn_block(h.reshape(ho, wo, c2), w2b_ref, m2cg_ref, m2gc_ref,
                       md2[2:3], md2[3:4], residual=True)

    o_ref[0] = h.reshape(ho, wo, c2)


def _group_masks(c, hw):
    cg = c // _GROUPS
    cid = jnp.arange(c, dtype=jnp.int32) // cg
    gid = jnp.arange(_GROUPS, dtype=jnp.int32)
    m_c2g = (cid[:, None] == gid[None, :]).astype(jnp.float32) / float(hw * cg)
    m_g2c = (gid[:, None] == cid[None, :]).astype(jnp.float32)
    return m_c2g, m_g2c


# ----------------------------------------------------------------------------
# Public wrapper: NCHW in / NCHW out, matching the PyTorch module.
# ----------------------------------------------------------------------------
def down_step(x_nchw, z, t, params):
    n, cin, h, w = x_nchw.shape
    assert h % 2 == 0 and w % 2 == 0, "MaxPool2d(2) requires even H and W"
    ho, wo = h // 2, w // 2

    p1, p2 = params["conv1"], params["conv2"]
    c1 = p1["conv1_w"].shape[3]
    c2 = p2["conv1_w"].shape[3]
    assert c1 % _GROUPS == 0 and c2 % _GROUPS == 0, "GroupNorm(8) needs C % 8 == 0"

    # All 16 Linear projections -> 2 pallas_calls; GN affine folded in (glue).
    mods1 = _unet_conv_mods(z, t, p1)      # (N, 4, C1)
    mods2 = _unet_conv_mods(z, t, p2)      # (N, 4, C2)

    # im2col conv weights, bf16 for the MXU (accumulation stays f32 in-kernel).
    w1a = p1["conv1_w"].reshape(9 * cin, c1).astype(jnp.bfloat16)
    w1b = p1["conv2_w"].reshape(9 * c1, c1).astype(jnp.bfloat16)
    w2a = p2["conv1_w"].reshape(9 * c1, c2).astype(jnp.bfloat16)
    w2b = p2["conv2_w"].reshape(9 * c2, c2).astype(jnp.bfloat16)

    # GroupNorm channel<->group membership constants, hoisted out of the kernel.
    m1cg, m1gc = _group_masks(c1, ho * wo)
    m2cg, m2gc = _group_masks(c2, ho * wo)

    # NCHW -> (N, 4, Ho, Wo, C): the 4 taps of each 2x2 pool window lead, so
    # the in-kernel pool is a cheap leading-axis max (no in-kernel relayout).
    x5 = (x_nchw.reshape(n, cin, ho, 2, wo, 2)
          .transpose(0, 3, 5, 2, 4, 1)
          .reshape(n, 4, ho, wo, cin))

    out = pl.pallas_call(
        _down_step_kernel,
        out_shape=jax.ShapeDtypeStruct((n, ho, wo, c2), jnp.float32),
        grid=(n,),
        in_specs=[
            pl.BlockSpec((1, 4, ho, wo, cin), lambda i: (i, 0, 0, 0, 0)),
            pl.BlockSpec((9 * cin, c1), lambda i: (0, 0)),
            pl.BlockSpec((9 * c1, c1), lambda i: (0, 0)),
            pl.BlockSpec((9 * c1, c2), lambda i: (0, 0)),
            pl.BlockSpec((9 * c2, c2), lambda i: (0, 0)),
            pl.BlockSpec((1, 4, c1), lambda i: (i, 0, 0)),
            pl.BlockSpec((1, 4, c2), lambda i: (i, 0, 0)),
            pl.BlockSpec((c1, _GROUPS), lambda i: (0, 0)),
            pl.BlockSpec((_GROUPS, c1), lambda i: (0, 0)),
            pl.BlockSpec((c2, _GROUPS), lambda i: (0, 0)),
            pl.BlockSpec((_GROUPS, c2), lambda i: (0, 0)),
        ],
        out_specs=pl.BlockSpec((1, ho, wo, c2), lambda i: (i, 0, 0, 0)),
        # Batch grid stays "parallel" so both v7x TensorCores get work; the
        # per-step working set is a few KiB, far under VMEM on v5e/v6e/v7x.
        # TODO(synk): tile over H rows (with a halo) for realistic UNet sizes.
        compiler_params=pltpu.CompilerParams(dimension_semantics=("parallel",)),
    )(x5, w1a, w1b, w2a, w2b, mods1, mods2, m1cg, m1gc, m2cg, m2gc)

    return jnp.transpose(out, (0, 3, 1, 2))    # NHWC -> NCHW


# ----------------------------------------------------------------------------
# Deterministic parameter initialization (synthetic, no checkpoint)
# ----------------------------------------------------------------------------
def _init_linear(key, din, dout):
    kw, kb = jax.random.split(key)
    bound = 1.0 / math.sqrt(din)
    w = jax.random.uniform(kw, (din, dout), jnp.float32, -bound, bound)
    b = jax.random.uniform(kb, (1, dout), jnp.float32, -bound, bound)
    return (w, b)


def _init_unet_conv(key, cin, cout, latent_dim, time_dim):
    cint = cout  # UNetConv default: int_channels = out_channels
    keys = jax.random.split(key, 10)
    return {
        "conv1_w": jax.random.normal(keys[0], (3, 3, cin, cint), jnp.float32)
        * (1.0 / math.sqrt(9 * cin)),
        "conv2_w": jax.random.normal(keys[1], (3, 3, cint, cout), jnp.float32)
        * (1.0 / math.sqrt(9 * cint)),
        "z_s1": _init_linear(keys[2], latent_dim, cint),
        "z_b1": _init_linear(keys[3], latent_dim, cint),
        "t_s1": _init_linear(keys[4], time_dim, cint),
        "t_b1": _init_linear(keys[5], time_dim, cint),
        "z_s2": _init_linear(keys[6], latent_dim, cout),
        "z_b2": _init_linear(keys[7], latent_dim, cout),
        "t_s2": _init_linear(keys[8], time_dim, cout),
        "t_b2": _init_linear(keys[9], time_dim, cout),
        "gn1_gamma": jnp.ones((1, cint), jnp.float32),
        "gn1_beta": jnp.zeros((1, cint), jnp.float32),
        "gn2_gamma": jnp.ones((1, cout), jnp.float32),
        "gn2_beta": jnp.zeros((1, cout), jnp.float32),
    }


def init_down_step(key, in_channels, out_channels, latent_dim, time_dim,
                   int_channels=None):
    int_channels = int_channels if int_channels else in_channels
    k1, k2 = jax.random.split(key)
    return {
        "conv1": _init_unet_conv(k1, in_channels, int_channels,
                                 latent_dim, time_dim),
        "conv2": _init_unet_conv(k2, int_channels, out_channels,
                                 latent_dim, time_dim),
    }


if __name__ == "__main__":
    key = jax.random.PRNGKey(0)
    kx, kz, kt, kp = jax.random.split(key, 4)

    # channels must be divisible by 8 (GroupNorm num_groups=8)
    N, C_IN, C_OUT, H, W = 2, 8, 16, 16, 16
    LATENT_DIM, TIME_DIM = 32, 32

    x = jax.random.normal(kx, (N, C_IN, H, W), jnp.float32)   # NCHW like PyTorch
    z = jax.random.normal(kz, (N, LATENT_DIM), jnp.float32)
    t = jax.random.normal(kt, (N, TIME_DIM), jnp.float32)

    params = init_down_step(kp, C_IN, C_OUT, LATENT_DIM, TIME_DIM)

    out = jax.block_until_ready(down_step(x, z, t, params))
    assert out.shape == (N, C_OUT, H // 2, W // 2), out.shape
    assert bool(jnp.all(jnp.isfinite(out)))
    print("KERNEL_OK")
</pallas_src>

<mosaic_0001>
module attributes {stable_mosaic.version = 11 : i64} {
  func.func @_mods_kernel(%arg0: memref<2x32xf32, #tpu.memory_space<vmem>>, %arg1: memref<2x32xf32, #tpu.memory_space<vmem>>, %arg2: memref<32x32xf32, #tpu.memory_space<vmem>>, %arg3: memref<1x32xf32, #tpu.memory_space<vmem>>, %arg4: memref<32x32xf32, #tpu.memory_space<vmem>>, %arg5: memref<1x32xf32, #tpu.memory_space<vmem>>, %arg6: memref<2x32xf32, #tpu.memory_space<vmem>>, %arg7: memref<2x32xf32, #tpu.memory_space<vmem>>) attributes {dimension_semantics = [], scalar_prefetch = 0 : i64, scratch_operands = 0 : i64, tpu.core_type = #tpu.core_type<tc>} {
    %c0 = arith.constant 0 : index
    %c0_0 = arith.constant 0 : index
    %0 = vector.load %arg0[%c0, %c0_0] : memref<2x32xf32, #tpu.memory_space<vmem>>, vector<2x32xf32>
    %c0_1 = arith.constant 0 : index
    %c0_2 = arith.constant 0 : index
    %1 = vector.load %arg2[%c0_1, %c0_2] : memref<32x32xf32, #tpu.memory_space<vmem>>, vector<32x32xf32>
    %cst = arith.constant dense<0.000000e+00> : vector<2x32xf32>
    %2 = tpu.matmul %0, %1, %cst {dimension_numbers = #tpu.dot_dimension_numbers<[1], [0], [0], [1], [0, 0, 1, 1], [], []>} : vector<2x32xf32>, vector<32x32xf32>, vector<2x32xf32> -> vector<2x32xf32>
    %c0_3 = arith.constant 0 : index
    %c0_4 = arith.constant 0 : index
    %3 = vector.load %arg3[%c0_3, %c0_4] : memref<1x32xf32, #tpu.memory_space<vmem>>, vector<1x32xf32>
    %4 = vector.broadcast %3 : vector<1x32xf32> to vector<2x32xf32>
    %5 = arith.addf %2, %4 : vector<2x32xf32>
    %c0_5 = arith.constant 0 : index
    %c0_6 = arith.constant 0 : index
    %6 = vector.load %arg6[%c0_5, %c0_6] : memref<2x32xf32, #tpu.memory_space<vmem>>, vector<2x32xf32>
    tpu.vector_store %arg6[%c0_5, %c0_6], %5 {strides = array<i32>} : memref<2x32xf32, #tpu.memory_space<vmem>>, vector<2x32xf32>,
    %c0_7 = arith.constant 0 : index
    %c0_8 = arith.constant 0 : index
    %7 = vector.load %arg1[%c0_7, %c0_8] : memref<2x32xf32, #tpu.memory_space<vmem>>, vector<2x32xf32>
    %c0_9 = arith.constant 0 : index
    %c0_10 = arith.constant 0 : index
    %8 = vector.load %arg4[%c0_9, %c0_10] : memref<32x32xf32, #tpu.memory_space<vmem>>, vector<32x32xf32>
    %cst_11 = arith.constant dense<0.000000e+00> : vector<2x32xf32>
    %9 = tpu.matmul %7, %8, %cst_11 {dimension_numbers = #tpu.dot_dimension_numbers<[1], [0], [0], [1], [0, 0, 1, 1], [], []>} : vector<2x32xf32>, vector<32x32xf32>, vector<2x32xf32> -> vector<2x32xf32>
    %c0_12 = arith.constant 0 : index
    %c0_13 = arith.constant 0 : index
    %10 = vector.load %arg5[%c0_12, %c0_13] : memref<1x32xf32, #tpu.memory_space<vmem>>, vector<1x32xf32>
    %11 = vector.broadcast %10 : vector<1x32xf32> to vector<2x32xf32>
    %12 = arith.addf %9, %11 : vector<2x32xf32>
    %c0_14 = arith.constant 0 : index
    %c0_15 = arith.constant 0 : index
    %13 = vector.load %arg7[%c0_14, %c0_15] : memref<2x32xf32, #tpu.memory_space<vmem>>, vector<2x32xf32>
    tpu.vector_store %arg7[%c0_14, %c0_15], %12 {strides = array<i32>} : memref<2x32xf32, #tpu.memory_space<vmem>>, vector<2x32xf32>,
    return
  }
}

</mosaic_0001>

<llo_original>
// kernel: tpu_custom_call.1
$region0: #{tpu_custom_call.1}
  #allocation0 [shape = 'u32[]', space=smem, size = 0x4, offset = 0x4, fixed_abs, tag = 'smem constant byte address 0x4 - core index']
  #allocation1 [shape = 'u32[72,128]{1,0:T(1,128)}', space=vmem, size = 0x9000, scoped, tag = 'internal scratch']
  %s0 = inlined_call_operand.hbm [shape: f32[2,32], index: 0, kind: input, shape index: {}]
  %s1 = inlined_call_operand.hbm [shape: f32[2,32], index: 1, kind: input, shape index: {}]
  %s2 = inlined_call_operand.hbm [shape: f32[32,32], index: 2, kind: input, shape index: {}]
  %s3 = inlined_call_operand.vmem [shape: f32[1,32], index: 3, kind: input, shape index: {}]
  %s4 = inlined_call_operand.hbm [shape: f32[32,32], index: 4, kind: input, shape index: {}]
  %s5 = inlined_call_operand.vmem [shape: f32[1,32], index: 5, kind: input, shape index: {}]
  %s6 = inlined_call_operand.hbm [shape: f32[2,32], index: 6, kind: output, shape index: {0}]
  %s7 = inlined_call_operand.hbm [shape: f32[2,32], index: 7, kind: output, shape index: {1}]
  %8 = xla_tuple %s6, %s7
  %s9 = sld [smem:[#allocation0]]
  $region58: #{tpu_custom_call.1} parent=0
    _
  %s11 = ssub.s32 1, %s9
  %s12 = scalar_select 0, %s11, %s9
  $region1: #{tpu_custom_call.1} parent=0
    #allocation2 [shape = 'u8[1024]{0}', space=vmem, size = 0x400, scoped, tag = 'input window, operand 0, single buffered']
    #allocation3 [shape = 's32[1]{0}', space=sflag, size = 0x4, scoped, tag = 'scoped memory for tpu_custom_call.1']
    #allocation4 [shape = 's32[1]{0}', space=sflag, size = 0x4, scoped, tag = 'scoped memory for tpu_custom_call.1']
    #allocation5 [shape = 'u8[1024]{0}', space=vmem, size = 0x400, scoped, tag = 'input window, operand 1, single buffered']
    #allocation6 [shape = 's32[1]{0}', space=sflag, size = 0x4, scoped, tag = 'scoped memory for tpu_custom_call.1']
    #allocation7 [shape = 'u8[16384]{0}', space=vmem, size = 0x4000, scoped, tag = 'input window, operand 2, single buffered']
    #allocation8 [shape = 'u8[16384]{0}', space=vmem, size = 0x4000, scoped, tag = 'input window, operand 4, single buffered']
    #allocation9 [shape = 's32[1]{0}', space=sflag, size = 0x4, scoped, tag = 'scoped memory for tpu_custom_call.1']
    #allocation10 [shape = 'u8[1024]{0}', space=vmem, size = 0x400, scoped, tag = 'output window, operand 0, single buffered']
    #allocation11 [shape = 'u8[1024]{0}', space=vmem, size = 0x400, scoped, tag = 'output window, operand 1, single buffered']
    #allocation12 [shape = 's32[1]{0}', space=sflag, size = 0x4, scoped, tag = 'scoped memory for tpu_custom_call.1']
    %13 = vsyncpa [#allocation3], 0
    %14 = vsyncpa [#allocation6], 0
    %15 = vsyncpa [#allocation9], 0
    %16 = vsyncpa [#allocation4], 0
    %17 = vsyncpa [#allocation12], 0
    // Predicated region
    $region2: #{tpu_custom_call.1} parent=1 // pred_check
      _
    $region3: #{tpu_custom_call.1} parent=1 // pred_check_branch
      %19 = sbr.rel (0) target = $region5
    $region4: #{tpu_custom_call.1} parent=1 // pred_region
      %21 = vsyncadd [#allocation3], 0
      %s23 = sshll.u32 %s0, 4
      %s24 = int_to_ptr.hbm [resolvable:$true] %s23
      %s25 = sshll.u32 [#allocation2], 4
      %s26 = int_to_ptr.vmem [resolvable:$true] %s25
      %28 = dma.hbm_to_vmem [thread:$0]  %s24, 32, %s26, [#allocation3]
    $region5: #{tpu_custom_call.1} parent=1 // pred_fallthru
      _
    // Predicated region
    $region6: #{tpu_custom_call.1} parent=1 // pred_check
      _
    $region7: #{tpu_custom_call.1} parent=1 // pred_check_branch
      %30 = sbr.rel (0) target = $region9
    $region8: #{tpu_custom_call.1} parent=1 // pred_region
      %32 = vsyncadd [#allocation6], 0
      %s34 = sshll.u32 %s1, 4
      %s35 = int_to_ptr.hbm [resolvable:$true] %s34
      %s36 = sshll.u32 [#allocation5], 4
      %s37 = int_to_ptr.vmem [resolvable:$true] %s36
      %39 = dma.hbm_to_vmem [thread:$0]  %s35, 32, %s37, [#allocation6]
    $region9: #{tpu_custom_call.1} parent=1 // pred_fallthru
      _
    // Predicated region
    $region10: #{tpu_custom_call.1} parent=1 // pred_check
      _
    $region11: #{tpu_custom_call.1} parent=1 // pred_check_branch
      %41 = sbr.rel (0) target = $region13
    $region12: #{tpu_custom_call.1} parent=1 // pred_region
      %43 = vsyncadd [#allocation6], 0
      %s44 = sshll.u32 %s2, 4
      %s45 = int_to_ptr.hbm [resolvable:$true] %s44
      %s46 = sshll.u32 [#allocation7], 4
      %s47 = int_to_ptr.vmem [resolvable:$true] %s46
      %52 = dma.hbm_to_vmem [thread:$0]  %s45, 512, %s47, [#allocation6], 128, 128, 8
    $region13: #{tpu_custom_call.1} parent=1 // pred_fallthru
      _
    // Predicated region
    $region14: #{tpu_custom_call.1} parent=1 // pred_check
      _
    $region15: #{tpu_custom_call.1} parent=1 // pred_check_branch
      %54 = sbr.rel (0) target = $region17
    $region16: #{tpu_custom_call.1} parent=1 // pred_region
      _
    $region17: #{tpu_custom_call.1} parent=1 // pred_fallthru
      _
    // Predicated region
    $region18: #{tpu_custom_call.1} parent=1 // pred_check
      _
    $region19: #{tpu_custom_call.1} parent=1 // pred_check_branch
      %56 = sbr.rel (0) target = $region21
    $region20: #{tpu_custom_call.1} parent=1 // pred_region
      %58 = vsyncadd [#allocation9], 0
      %s59 = sshll.u32 %s4, 4
      %s60 = int_to_ptr.hbm [resolvable:$true] %s59
      %s61 = sshll.u32 [#allocation8], 4
      %s62 = int_to_ptr.vmem [resolvable:$true] %s61
      %67 = dma.hbm_to_vmem [thread:$0]  %s60, 512, %s62, [#allocation9], 128, 128, 8
    $region21: #{tpu_custom_call.1} parent=1 // pred_fallthru
      _
    // Predicated region
    $region22: #{tpu_custom_call.1} parent=1 // pred_check
      _
    $region23: #{tpu_custom_call.1} parent=1 // pred_check_branch
      %69 = sbr.rel (0) target = $region25
    $region24: #{tpu_custom_call.1} parent=1 // pred_region
      _
    $region25: #{tpu_custom_call.1} parent=1 // pred_fallthru
      _
    // Predicated region
    $region26: #{tpu_custom_call.1} parent=1 // pred_check
      _
    $region27: #{tpu_custom_call.1} parent=1 // pred_check_branch
      %71 = sbr.rel (0) target = $region29
    $region28: #{tpu_custom_call.1} parent=1 // pred_region
      %73 = dma.done [#allocation3], 32
    $region29: #{tpu_custom_call.1} parent=1 // pred_fallthru
      _
    // Predicated region
    $region30: #{tpu_custom_call.1} parent=1 // pred_check
      _
    $region31: #{tpu_custom_call.1} parent=1 // pred_check_branch
      %75 = sbr.rel (0) target = $region33
    $region32: #{tpu_custom_call.1} parent=1 // pred_region
      %77 = dma.done [#allocation6], 32
    $region33: #{tpu_custom_call.1} parent=1 // pred_fallthru
      _
    // Predicated region
    $region34: #{tpu_custom_call.1} parent=1 // pred_check
      _
    $region35: #{tpu_custom_call.1} parent=1 // pred_check_branch
      %79 = sbr.rel (0) target = $region37
    $region36: #{tpu_custom_call.1} parent=1 // pred_region
      %81 = dma.done [#allocation6], 512
    $region37: #{tpu_custom_call.1} parent=1 // pred_fallthru
      _
    // Predicated region
    $region38: #{tpu_custom_call.1} parent=1 // pred_check
      _
    $region39: #{tpu_custom_call.1} parent=1 // pred_check_branch
      %83 = sbr.rel (0) target = $region41
    $region40: #{tpu_custom_call.1} parent=1 // pred_region
      %85 = dma.done [#allocation9], 512
    $region41: #{tpu_custom_call.1} parent=1 // pred_fallthru
      _
    %v86 = vld [vmem:[#allocation2] sm:$0x3]
    %v87 = vld [vmem:[#allocation7] sm:$0xff]
    %v88 = vld [vmem:[#allocation7 + $0x8] sm:$0xff]
    %v89 = vld [vmem:[#allocation7 + $0x10] sm:$0xff]
    %v90 = vld [vmem:[#allocation7 + $0x18] sm:$0xff]
    %v91 = vld [vmem:[%s3] sm:$0x1]
    %v93 = vperm.slane %v91, 0
    %vm95 = vcmask 261120
    %v97 = vsel %vm95, %v86, 0
    %99 = vmatpush.msra.mxu0 0.0
    %100 = vmatpush.msra.mxu0 0.0
    %101 = vmatpush.msra.mxu0 0.0
    %102 = vmatpush.msra.mxu0 0.0
    %103 = vmatpush.msra.mxu0 0.0
    %104 = vmatpush.msra.mxu0 0.0
    %105 = vmatpush.msra.mxu0 0.0
    %106 = vmatpush.msra.mxu0 0.0
    %107 = vmatpush.msra.mxu0 0.0
    %108 = vmatpush.msra.mxu0 0.0
    %109 = vmatpush.msra.mxu0 0.0
    %110 = vmatpush.msra.mxu0 0.0
    %111 = vmatpush.msra.mxu0 %v90
    %112 = vmatpush.msra.mxu0 %v89
    %113 = vmatpush.msra.mxu0 %v88
    %114 = vmatpush.msra.mxu0 %v87
    %115 = vmatmul.f32.gmra.mxu0 %v97
    %v116 = vpop.f32.mrf.mxu0
    %v117 = vadd.f32 %v93, %v116
    %118 = vdwg.mxu0
    %vm119 = vcmask 254976
    %120 = vst.msk [vmem:[#allocation10] sm:$0x3] %vm119, %v117
    %v121 = vld [vmem:[#allocation5] sm:$0x3]
    %v122 = vld [vmem:[#allocation8] sm:$0xff]
    %v123 = vld [vmem:[#allocation8 + $0x8] sm:$0xff]
    %v124 = vld [vmem:[#allocation8 + $0x10] sm:$0xff]
    %v125 = vld [vmem:[#allocation8 + $0x18] sm:$0xff]
    %v126 = vld [vmem:[%s5] sm:$0x1]
    %v128 = vperm.slane %v126, 0
    %v131 = vsel %vm95, %v121, 0
    %133 = vmatpush.msra.mxu0 0.0
    %134 = vmatpush.msra.mxu0 0.0
    %135 = vmatpush.msra.mxu0 0.0
    %136 = vmatpush.msra.mxu0 0.0
    %137 = vmatpush.msra.mxu0 0.0
    %138 = vmatpush.msra.mxu0 0.0
    %139 = vmatpush.msra.mxu0 0.0
    %140 = vmatpush.msra.mxu0 0.0
    %141 = vmatpush.msra.mxu0 0.0
    %142 = vmatpush.msra.mxu0 0.0
    %143 = vmatpush.msra.mxu0 0.0
    %144 = vmatpush.msra.mxu0 0.0
    %145 = vmatpush.msra.mxu0 %v125
    %146 = vmatpush.msra.mxu0 %v124
    %147 = vmatpush.msra.mxu0 %v123
    %148 = vmatpush.msra.mxu0 %v122
    %149 = vmatmul.f32.gmra.mxu0 %v131
    %v150 = vpop.f32.mrf.mxu0
    %v151 = vadd.f32 %v128, %v150
    %152 = vdwg.mxu0
    %153 = vst.msk [vmem:[#allocation11] sm:$0x3] %vm119, %v151
    // Predicated region
    $region42: #{tpu_custom_call.1} parent=1 // pred_check
      _
    $region43: #{tpu_custom_call.1} parent=1 // pred_check_branch
      %155 = sbr.rel (0) target = $region45
    $region44: #{tpu_custom_call.1} parent=1 // pred_region
      %157 = vsyncadd [#allocation4], 0
      %s159 = sshll.u32 [#allocation10], 4
      %s160 = int_to_ptr.vmem [resolvable:$true] %s159
      %s161 = sshll.u32 %s6, 4
      %s162 = int_to_ptr.hbm [resolvable:$true] %s161
      %164 = dma.vmem_to_hbm [thread:$0]  %s160, 32, %s162, [#allocation4]
    $region45: #{tpu_custom_call.1} parent=1 // pred_fallthru
      _
    // Predicated region
    $region46: #{tpu_custom_call.1} parent=1 // pred_check
      _
    $region47: #{tpu_custom_call.1} parent=1 // pred_check_branch
      %166 = sbr.rel (0) target = $region49
    $region48: #{tpu_custom_call.1} parent=1 // pred_region
      %168 = vsyncadd [#allocation12], 0
      %s170 = sshll.u32 [#allocation11], 4
      %s171 = int_to_ptr.vmem [resolvable:$true] %s170
      %s172 = sshll.u32 %s7, 4
      %s173 = int_to_ptr.hbm [resolvable:$true] %s172
      %175 = dma.vmem_to_hbm [thread:$0]  %s171, 32, %s173, [#allocation12]
    $region49: #{tpu_custom_call.1} parent=1 // pred_fallthru
      _
    // Predicated region
    $region50: #{tpu_custom_call.1} parent=1 // pred_check
      _
    $region51: #{tpu_custom_call.1} parent=1 // pred_check_branch
      %177 = sbr.rel (0) target = $region53
    $region52: #{tpu_custom_call.1} parent=1 // pred_region
      %179 = dma.done [#allocation4], 32
    $region53: #{tpu_custom_call.1} parent=1 // pred_fallthru
      _
    // Predicated region
    $region54: #{tpu_custom_call.1} parent=1 // pred_check
      _
    $region55: #{tpu_custom_call.1} parent=1 // pred_check_branch
      %181 = sbr.rel (0) target = $region57
    $region56: #{tpu_custom_call.1} parent=1 // pred_region
      %183 = dma.done [#allocation12], 32
    $region57: #{tpu_custom_call.1} parent=1 // pred_fallthru
      _
    %184 = vsyncpa [#allocation3], 1
    %185 = vsyncpa [#allocation6], 1
    %186 = vsyncpa [#allocation9], 1
    %187 = vsyncpa [#allocation4], 1
    %188 = vsyncpa [#allocation12], 1

</llo_original>
